<compile_context>
chip_gen: v6e
topology: v6e:2x2x1
jax: 0.10.0
libtpu: 0.0.40
codegen_flags: <defaults>
</compile_context>

<pallas_src>
import functools

import jax
import jax.numpy as jnp
from jax.experimental import pallas as pl
from jax.experimental.pallas import tpu as pltpu


def _round_up(x, m):
    return ((x + m - 1) // m) * m


# ----------------------------------------------------------------------------
# Parameter preparation: fold BN(eval) + bias, pad to (8,128)-aligned layouts.
# Runs ONCE, outside the hot path.
# ----------------------------------------------------------------------------
def _fold_bn(layer, eps=1e-5):
    w, b = layer["w"], layer["b"]
    n = w.shape[0]
    bn = layer.get("bn", None)
    if bn is not None:
        gamma, beta, rmean, rvar = bn
        scale = gamma / jnp.sqrt(rvar + eps)        # [N]
        shift = beta - rmean * scale                # [N]
    else:
        scale = jnp.ones((n,), jnp.float32)
        shift = jnp.zeros((n,), jnp.float32)
    return scale, b * scale + shift                 # fold linear bias through BN


def _pad_layer(layer, kp, np_, pad_bias_value=0.0):
    """Return (W^T padded [kp, np_], scale [1, np_], bias [1, np_]) in f32."""
    w = layer["w"]                                  # [N, K]
    n, k = w.shape
    scale, bias = _fold_bn(layer)
    wt = jnp.zeros((kp, np_), jnp.float32).at[:k, :n].set(w.T.astype(jnp.float32))
    s = jnp.ones((1, np_), jnp.float32).at[0, :n].set(scale)
    b = jnp.full((1, np_), pad_bias_value, jnp.float32).at[0, :n].set(bias)
    return wt, s, b


def prepare_params(params, vae_dims, nn_dims):
    in_p = _round_up(vae_dims[0], 128)
    hid_p = _round_up(vae_dims[1], 128)
    lat_p = _round_up(vae_dims[2], 128)
    n1_p = _round_up(nn_dims[1], 128)
    n2_p = _round_up(nn_dims[2], 128)
    c_p = _round_up(nn_dims[3], 128)

    enc1 = _pad_layer(params["enc1"], in_p, hid_p)

    # Merge e_mean / e_log_var into one head along the padded output-feature axis.
    mw, ms, mb = _pad_layer(params["e_mean"], hid_p, lat_p)
    vw, vs, vb = _pad_layer(params["e_log_var"], hid_p, lat_p)
    head = (jnp.concatenate([mw, vw], axis=1),
            jnp.concatenate([ms, vs], axis=1),
            jnp.concatenate([mb, vb], axis=1))

    dec1 = _pad_layer(params["dec1"], lat_p, hid_p)
    decl = _pad_layer(params["dec_last"], hid_p, in_p)
    nn1 = _pad_layer(params["nn1"], lat_p, n1_p)
    nn2 = _pad_layer(params["nn2"], n1_p, n2_p)
    # Padded logit lanes get bias -1e30 so the softmax ignores them (no in-kernel mask).
    nn3 = _pad_layer(params["nn3"], n2_p, c_p, pad_bias_value=-1e30)

    return (*enc1, *head, *dec1, *decl, *nn1, *nn2, *nn3)


# ----------------------------------------------------------------------------
# Single fused kernel: whole network, all operands resident in VMEM.
# ----------------------------------------------------------------------------
def _single_sparse_fused_kernel(
        x_ref, eps_ref,
        enc1_w, enc1_s, enc1_b,
        head_w, head_s, head_b,
        dec1_w, dec1_s, dec1_b,
        decl_w, decl_s, decl_b,
        nn1_w, nn1_s, nn1_b,
        nn2_w, nn2_s, nn2_b,
        nn3_w, nn3_s, nn3_b,
        mean_ref, logvar_ref, recon_ref, ypred_ref,
        *, lat_p):

    def dense(h, w_ref, s_ref, b_ref):
        a = jnp.dot(h, w_ref[...], preferred_element_type=jnp.float32)
        return a * s_ref[...] + b_ref[...]          # folded BN(eval) + linear bias

    x = x_ref[...]

    # --- VAE encoder (Dropout = identity in eval mode) ---
    h = jnp.maximum(dense(x, enc1_w, enc1_s, enc1_b), 0.0)

    # --- merged mean / log_var heads ---
    ml = dense(h, head_w, head_s, head_b)
    mean = ml[:, :lat_p]
    log_var = ml[:, lat_p:]
    mean_ref[...] = mean
    logvar_ref[...] = log_var

    # --- reparameterization fused as epilogue (exp on EUP) ---
    z = mean + eps_ref[...] * jnp.exp(0.5 * log_var)

    # --- VAE decoder ---
    d = jnp.maximum(dense(z, dec1_w, dec1_s, dec1_b), 0.0)
    r = dense(d, decl_w, decl_s, decl_b)
    recon_ref[...] = pl.reciprocal(1.0 + jnp.exp(-r), approx=True)   # sigmoid

    # --- classifier on the latent mean ---
    n = jnp.maximum(dense(mean, nn1_w, nn1_s, nn1_b), 0.0)
    n = jnp.maximum(dense(n, nn2_w, nn2_s, nn2_b), 0.0)
    logits = dense(n, nn3_w, nn3_s, nn3_b)          # padded lanes biased to -1e30
    m = jnp.max(logits, axis=-1, keepdims=True)
    e = jnp.exp(logits - m)
    ypred_ref[...] = e * pl.reciprocal(jnp.sum(e, axis=-1, keepdims=True), approx=True)


def single_sparse_infer(flat_params, x, eps_noise, *, vae_dims, nn_dims):
    """Infer-mode forward. flat_params from prepare_params (pre-padded, pre-folded)."""
    m = x.shape[0]
    mp = _round_up(m, 8)
    in_p = flat_params[0].shape[0]                  # enc1 W^T: [in_p, hid_p]
    lat_p = flat_params[3].shape[1] // 2            # merged head W^T: [hid_p, 2*lat_p]
    c_p = flat_params[-3].shape[1]                  # nn3 W^T: [n2_p, c_p]

    # Pad the network input and the noise exactly once (f32, lane/sublane aligned).
    x_p = jnp.zeros((mp, in_p), jnp.float32).at[:m, :x.shape[1]].set(
        x.astype(jnp.float32))
    eps_p = jnp.zeros((mp, lat_p), jnp.float32).at[:m, :eps_noise.shape[1]].set(
        eps_noise.astype(jnp.float32))

    n_inputs = 2 + len(flat_params)
    kernel = functools.partial(_single_sparse_fused_kernel, lat_p=lat_p)

    mean_p, logvar_p, recon_p, ypred_p = pl.pallas_call(
        kernel,
        out_shape=(
            jax.ShapeDtypeStruct((mp, lat_p), jnp.float32),
            jax.ShapeDtypeStruct((mp, lat_p), jnp.float32),
            jax.ShapeDtypeStruct((mp, in_p), jnp.float32),
            jax.ShapeDtypeStruct((mp, c_p), jnp.float32),
        ),
        # No grid: one invocation, every operand whole-array resident in VMEM
        # (no double-buffering, no per-layer launch or HBM round-trips).
        in_specs=[pl.BlockSpec(memory_space=pltpu.MemorySpace.VMEM)] * n_inputs,
        out_specs=(pl.BlockSpec(memory_space=pltpu.MemorySpace.VMEM),) * 4,
    )(x_p, eps_p, *flat_params)

    latent = vae_dims[2]
    return (mean_p[:m, :latent],
            logvar_p[:m, :latent],
            recon_p[:m, :vae_dims[0]],
            ypred_p[:m, :nn_dims[3]])


# ----------------------------------------------------------------------------
# Deterministic parameter init (PyTorch-style Linear init; randomized BN stats
# so the folded scale/shift path is actually exercised)
# ----------------------------------------------------------------------------
def init_layer(key, n_in, n_out, with_bn=True):
    kw, kb, k1, k2, k3, k4 = jax.random.split(key, 6)
    bound = 1.0 / (n_in ** 0.5)
    layer = {
        "w": jax.random.uniform(kw, (n_out, n_in), jnp.float32, -bound, bound),
        "b": jax.random.uniform(kb, (n_out,), jnp.float32, -bound, bound),
    }
    if with_bn:
        gamma = jax.random.uniform(k1, (n_out,), jnp.float32, 0.5, 1.5)
        beta = 0.1 * jax.random.normal(k2, (n_out,), jnp.float32)
        rmean = 0.1 * jax.random.normal(k3, (n_out,), jnp.float32)
        rvar = jax.random.uniform(k4, (n_out,), jnp.float32, 0.5, 1.5)
        layer["bn"] = (gamma, beta, rmean, rvar)
    return layer


# ----------------------------------------------------------------------------
# Plain-JAX f32 reference (same eval-mode semantics)
# ----------------------------------------------------------------------------
def _ref_layer(x, layer, activation, eps=1e-5):
    h = x @ layer["w"].T + layer["b"]
    bn = layer.get("bn", None)
    if bn is not None:
        gamma, beta, rmean, rvar = bn
        h = (h - rmean) / jnp.sqrt(rvar + eps) * gamma + beta
    if activation == "relu":
        h = jnp.maximum(h, 0.0)
    elif activation == "sigmoid":
        h = jax.nn.sigmoid(h)
    elif activation == "softmax":
        h = jax.nn.softmax(h, axis=1)
    return h


def _ref_forward(params, x, eps_noise):
    h = _ref_layer(x, params["enc1"], "relu")
    mean = _ref_layer(h, params["e_mean"], "none")
    log_var = _ref_layer(h, params["e_log_var"], "none")
    z = mean + eps_noise * jnp.exp(0.5 * log_var)
    d = _ref_layer(z, params["dec1"], "relu")
    recon_x = _ref_layer(d, params["dec_last"], "sigmoid")
    n = _ref_layer(mean, params["nn1"], "relu")
    n = _ref_layer(n, params["nn2"], "relu")
    y_pred = _ref_layer(n, params["nn3"], "softmax")
    return mean, log_var, recon_x, y_pred


if __name__ == "__main__":
    key = jax.random.PRNGKey(0)
    keys = jax.random.split(key, 12)

    VAE_dims = (32, 64, 16)     # input, hidden, latent
    NN_dims = (16, 32, 16, 4)   # latent -> hidden -> hidden -> classes
    batch = 8

    params = {
        "enc1":      init_layer(keys[0], VAE_dims[0], VAE_dims[1]),
        "e_mean":    init_layer(keys[1], VAE_dims[1], VAE_dims[2]),
        "e_log_var": init_layer(keys[2], VAE_dims[1], VAE_dims[2]),
        "dec1":      init_layer(keys[3], VAE_dims[2], VAE_dims[1]),
        "dec_last":  init_layer(keys[4], VAE_dims[1], VAE_dims[0]),
        "nn1":       init_layer(keys[5], NN_dims[0], NN_dims[1]),
        "nn2":       init_layer(keys[6], NN_dims[1], NN_dims[2]),
        "nn3":       init_layer(keys[7], NN_dims[2], NN_dims[3], with_bn=False),
    }

    x = jax.random.normal(keys[8], (batch, VAE_dims[0]), jnp.float32)
    # torch.randn_like(sigma) -> deterministic Gaussian noise supplied explicitly.
    eps_noise = jax.random.normal(keys[9], (batch, VAE_dims[-1]), jnp.float32)

    # Pad / fold all constants ONCE, outside the hot path.
    flat_params = jax.block_until_ready(prepare_params(params, VAE_dims, NN_dims))

    fwd = jax.jit(functools.partial(single_sparse_infer,
                                    vae_dims=VAE_dims, nn_dims=NN_dims))
    mean, log_var, recon_x, y_pred = jax.block_until_ready(
        fwd(flat_params, x, eps_noise))

    r_mean, r_log_var, r_recon, r_pred = _ref_forward(params, x, eps_noise)

    assert mean.shape == (batch, VAE_dims[-1])
    assert log_var.shape == (batch, VAE_dims[-1])
    assert recon_x.shape == (batch, VAE_dims[0])
    assert y_pred.shape == (batch, NN_dims[-1])

    # f32 activations end-to-end; tolerance covers MXU default-precision matmuls
    # and the approx EUP reciprocals in the sigmoid/softmax epilogues.
    assert jnp.allclose(mean, r_mean, atol=3e-2, rtol=3e-2)
    assert jnp.allclose(log_var, r_log_var, atol=3e-2, rtol=3e-2)
    assert jnp.allclose(recon_x, r_recon, atol=3e-2, rtol=3e-2)
    assert jnp.allclose(y_pred, r_pred, atol=3e-2, rtol=3e-2)
    assert jnp.allclose(jnp.sum(y_pred, axis=1), 1.0, atol=3e-3)

    print("KERNEL_OK")
</pallas_src>

<mosaic_0001>
module attributes {stable_mosaic.version = 11 : i64} {
  func.func @_single_sparse_fused_kernel(%arg0: memref<8x128xf32, #tpu.memory_space<vmem>>, %arg1: memref<8x128xf32, #tpu.memory_space<vmem>>, %arg2: memref<128x128xf32, #tpu.memory_space<vmem>>, %arg3: memref<1x128xf32, #tpu.memory_space<vmem>>, %arg4: memref<1x128xf32, #tpu.memory_space<vmem>>, %arg5: memref<128x256xf32, #tpu.memory_space<vmem>>, %arg6: memref<1x256xf32, #tpu.memory_space<vmem>>, %arg7: memref<1x256xf32, #tpu.memory_space<vmem>>, %arg8: memref<128x128xf32, #tpu.memory_space<vmem>>, %arg9: memref<1x128xf32, #tpu.memory_space<vmem>>, %arg10: memref<1x128xf32, #tpu.memory_space<vmem>>, %arg11: memref<128x128xf32, #tpu.memory_space<vmem>>, %arg12: memref<1x128xf32, #tpu.memory_space<vmem>>, %arg13: memref<1x128xf32, #tpu.memory_space<vmem>>, %arg14: memref<128x128xf32, #tpu.memory_space<vmem>>, %arg15: memref<1x128xf32, #tpu.memory_space<vmem>>, %arg16: memref<1x128xf32, #tpu.memory_space<vmem>>, %arg17: memref<128x128xf32, #tpu.memory_space<vmem>>, %arg18: memref<1x128xf32, #tpu.memory_space<vmem>>, %arg19: memref<1x128xf32, #tpu.memory_space<vmem>>, %arg20: memref<128x128xf32, #tpu.memory_space<vmem>>, %arg21: memref<1x128xf32, #tpu.memory_space<vmem>>, %arg22: memref<1x128xf32, #tpu.memory_space<vmem>>, %arg23: memref<8x128xf32, #tpu.memory_space<vmem>>, %arg24: memref<8x128xf32, #tpu.memory_space<vmem>>, %arg25: memref<8x128xf32, #tpu.memory_space<vmem>>, %arg26: memref<8x128xf32, #tpu.memory_space<vmem>>) attributes {dimension_semantics = [], scalar_prefetch = 0 : i64, scratch_operands = 0 : i64, tpu.core_type = #tpu.core_type<tc>} {
    %c0 = arith.constant 0 : index
    %c0_0 = arith.constant 0 : index
    %0 = vector.load %arg0[%c0, %c0_0] : memref<8x128xf32, #tpu.memory_space<vmem>>, vector<8x128xf32>
    %c0_1 = arith.constant 0 : index
    %c0_2 = arith.constant 0 : index
    %1 = vector.load %arg2[%c0_1, %c0_2] : memref<128x128xf32, #tpu.memory_space<vmem>>, vector<128x128xf32>
    %cst = arith.constant dense<0.000000e+00> : vector<8x128xf32>
    %2 = tpu.matmul %0, %1, %cst {dimension_numbers = #tpu.dot_dimension_numbers<[1], [0], [0], [1], [0, 0, 1, 1], [], []>} : vector<8x128xf32>, vector<128x128xf32>, vector<8x128xf32> -> vector<8x128xf32>
    %c0_3 = arith.constant 0 : index
    %c0_4 = arith.constant 0 : index
    %3 = vector.load %arg3[%c0_3, %c0_4] : memref<1x128xf32, #tpu.memory_space<vmem>>, vector<1x128xf32>
    %4 = vector.broadcast %3 : vector<1x128xf32> to vector<8x128xf32>
    %5 = arith.mulf %2, %4 : vector<8x128xf32>
    %c0_5 = arith.constant 0 : index
    %c0_6 = arith.constant 0 : index
    %6 = vector.load %arg4[%c0_5, %c0_6] : memref<1x128xf32, #tpu.memory_space<vmem>>, vector<1x128xf32>
    %7 = vector.broadcast %6 : vector<1x128xf32> to vector<8x128xf32>
    %8 = arith.addf %5, %7 : vector<8x128xf32>
    %cst_7 = arith.constant 0.000000e+00 : f32
    %9 = vector.broadcast %cst_7 : f32 to vector<8x128xf32>
    %10 = arith.maximumf %8, %9 : vector<8x128xf32>
    %c0_8 = arith.constant 0 : index
    %c0_9 = arith.constant 0 : index
    %11 = vector.load %arg5[%c0_8, %c0_9] : memref<128x256xf32, #tpu.memory_space<vmem>>, vector<128x256xf32>
    %cst_10 = arith.constant dense<0.000000e+00> : vector<8x256xf32>
    %12 = tpu.matmul %10, %11, %cst_10 {dimension_numbers = #tpu.dot_dimension_numbers<[1], [0], [0], [1], [0, 0, 1, 1], [], []>} : vector<8x128xf32>, vector<128x256xf32>, vector<8x256xf32> -> vector<8x256xf32>
    %c0_11 = arith.constant 0 : index
    %c0_12 = arith.constant 0 : index
    %13 = vector.load %arg6[%c0_11, %c0_12] : memref<1x256xf32, #tpu.memory_space<vmem>>, vector<1x256xf32>
    %14 = vector.broadcast %13 : vector<1x256xf32> to vector<8x256xf32>
    %15 = arith.mulf %12, %14 : vector<8x256xf32>
    %c0_13 = arith.constant 0 : index
    %c0_14 = arith.constant 0 : index
    %16 = vector.load %arg7[%c0_13, %c0_14] : memref<1x256xf32, #tpu.memory_space<vmem>>, vector<1x256xf32>
    %17 = vector.broadcast %16 : vector<1x256xf32> to vector<8x256xf32>
    %18 = arith.addf %15, %17 : vector<8x256xf32>
    %19 = vector.extract_strided_slice %18 {offsets = [0, 0], sizes = [8, 128], strides = [1, 1]} : vector<8x256xf32> to vector<8x128xf32>
    %20 = vector.extract_strided_slice %18 {offsets = [0, 128], sizes = [8, 128], strides = [1, 1]} : vector<8x256xf32> to vector<8x128xf32>
    %c0_15 = arith.constant 0 : index
    %c0_16 = arith.constant 0 : index
    %21 = vector.load %arg23[%c0_15, %c0_16] : memref<8x128xf32, #tpu.memory_space<vmem>>, vector<8x128xf32>
    tpu.vector_store %arg23[%c0_15, %c0_16], %19 {strides = array<i32>} : memref<8x128xf32, #tpu.memory_space<vmem>>, vector<8x128xf32>,
    %c0_17 = arith.constant 0 : index
    %c0_18 = arith.constant 0 : index
    %22 = vector.load %arg24[%c0_17, %c0_18] : memref<8x128xf32, #tpu.memory_space<vmem>>, vector<8x128xf32>
    tpu.vector_store %arg24[%c0_17, %c0_18], %20 {strides = array<i32>} : memref<8x128xf32, #tpu.memory_space<vmem>>, vector<8x128xf32>,
    %c0_19 = arith.constant 0 : index
    %c0_20 = arith.constant 0 : index
    %23 = vector.load %arg1[%c0_19, %c0_20] : memref<8x128xf32, #tpu.memory_space<vmem>>, vector<8x128xf32>
    %cst_21 = arith.constant 5.000000e-01 : f32
    %24 = vector.broadcast %cst_21 : f32 to vector<8x128xf32>
    %25 = arith.mulf %24, %20 : vector<8x128xf32>
    %26 = math.exp %25 : vector<8x128xf32>
    %27 = arith.mulf %23, %26 : vector<8x128xf32>
    %28 = arith.addf %19, %27 : vector<8x128xf32>
    %c0_22 = arith.constant 0 : index
    %c0_23 = arith.constant 0 : index
    %29 = vector.load %arg8[%c0_22, %c0_23] : memref<128x128xf32, #tpu.memory_space<vmem>>, vector<128x128xf32>
    %cst_24 = arith.constant dense<0.000000e+00> : vector<8x128xf32>
    %30 = tpu.matmul %28, %29, %cst_24 {dimension_numbers = #tpu.dot_dimension_numbers<[1], [0], [0], [1], [0, 0, 1, 1], [], []>} : vector<8x128xf32>, vector<128x128xf32>, vector<8x128xf32> -> vector<8x128xf32>
    %c0_25 = arith.constant 0 : index
    %c0_26 = arith.constant 0 : index
    %31 = vector.load %arg9[%c0_25, %c0_26] : memref<1x128xf32, #tpu.memory_space<vmem>>, vector<1x128xf32>
    %32 = vector.broadcast %31 : vector<1x128xf32> to vector<8x128xf32>
    %33 = arith.mulf %30, %32 : vector<8x128xf32>
    %c0_27 = arith.constant 0 : index
    %c0_28 = arith.constant 0 : index
    %34 = vector.load %arg10[%c0_27, %c0_28] : memref<1x128xf32, #tpu.memory_space<vmem>>, vector<1x128xf32>
    %35 = vector.broadcast %34 : vector<1x128xf32> to vector<8x128xf32>
    %36 = arith.addf %33, %35 : vector<8x128xf32>
    %cst_29 = arith.constant 0.000000e+00 : f32
    %37 = vector.broadcast %cst_29 : f32 to vector<8x128xf32>
    %38 = arith.maximumf %36, %37 : vector<8x128xf32>
    %c0_30 = arith.constant 0 : index
    %c0_31 = arith.constant 0 : index
    %39 = vector.load %arg11[%c0_30, %c0_31] : memref<128x128xf32, #tpu.memory_space<vmem>>, vector<128x128xf32>
    %cst_32 = arith.constant dense<0.000000e+00> : vector<8x128xf32>
    %40 = tpu.matmul %38, %39, %cst_32 {dimension_numbers = #tpu.dot_dimension_numbers<[1], [0], [0], [1], [0, 0, 1, 1], [], []>} : vector<8x128xf32>, vector<128x128xf32>, vector<8x128xf32> -> vector<8x128xf32>
    %c0_33 = arith.constant 0 : index
    %c0_34 = arith.constant 0 : index
    %41 = vector.load %arg12[%c0_33, %c0_34] : memref<1x128xf32, #tpu.memory_space<vmem>>, vector<1x128xf32>
    %42 = vector.broadcast %41 : vector<1x128xf32> to vector<8x128xf32>
    %43 = arith.mulf %40, %42 : vector<8x128xf32>
    %c0_35 = arith.constant 0 : index
    %c0_36 = arith.constant 0 : index
    %44 = vector.load %arg13[%c0_35, %c0_36] : memref<1x128xf32, #tpu.memory_space<vmem>>, vector<1x128xf32>
    %45 = vector.broadcast %44 : vector<1x128xf32> to vector<8x128xf32>
    %46 = arith.addf %43, %45 : vector<8x128xf32>
    %cst_37 = arith.constant 0.000000e+00 : f32
    %47 = vector.broadcast %cst_37 : f32 to vector<8x128xf32>
    %48 = arith.subf %47, %46 : vector<8x128xf32>
    %49 = math.exp %48 : vector<8x128xf32>
    %cst_38 = arith.constant 1.000000e+00 : f32
    %50 = vector.broadcast %cst_38 : f32 to vector<8x128xf32>
    %51 = arith.addf %50, %49 : vector<8x128xf32>
    %52 = tpu.reciprocal %51 {approx = true} : vector<8x128xf32> -> vector<8x128xf32>
    %c0_39 = arith.constant 0 : index
    %c0_40 = arith.constant 0 : index
    %53 = vector.load %arg25[%c0_39, %c0_40] : memref<8x128xf32, #tpu.memory_space<vmem>>, vector<8x128xf32>
    tpu.vector_store %arg25[%c0_39, %c0_40], %52 {strides = array<i32>} : memref<8x128xf32, #tpu.memory_space<vmem>>, vector<8x128xf32>,
    %c0_41 = arith.constant 0 : index
    %c0_42 = arith.constant 0 : index
    %54 = vector.load %arg14[%c0_41, %c0_42] : memref<128x128xf32, #tpu.memory_space<vmem>>, vector<128x128xf32>
    %cst_43 = arith.constant dense<0.000000e+00> : vector<8x128xf32>
    %55 = tpu.matmul %19, %54, %cst_43 {dimension_numbers = #tpu.dot_dimension_numbers<[1], [0], [0], [1], [0, 0, 1, 1], [], []>} : vector<8x128xf32>, vector<128x128xf32>, vector<8x128xf32> -> vector<8x128xf32>
    %c0_44 = arith.constant 0 : index
    %c0_45 = arith.constant 0 : index
    %56 = vector.load %arg15[%c0_44, %c0_45] : memref<1x128xf32, #tpu.memory_space<vmem>>, vector<1x128xf32>
    %57 = vector.broadcast %56 : vector<1x128xf32> to vector<8x128xf32>
    %58 = arith.mulf %55, %57 : vector<8x128xf32>
    %c0_46 = arith.constant 0 : index
    %c0_47 = arith.constant 0 : index
    %59 = vector.load %arg16[%c0_46, %c0_47] : memref<1x128xf32, #tpu.memory_space<vmem>>, vector<1x128xf32>
    %60 = vector.broadcast %59 : vector<1x128xf32> to vector<8x128xf32>
    %61 = arith.addf %58, %60 : vector<8x128xf32>
    %cst_48 = arith.constant 0.000000e+00 : f32
    %62 = vector.broadcast %cst_48 : f32 to vector<8x128xf32>
    %63 = arith.maximumf %61, %62 : vector<8x128xf32>
    %c0_49 = arith.constant 0 : index
    %c0_50 = arith.constant 0 : index
    %64 = vector.load %arg17[%c0_49, %c0_50] : memref<128x128xf32, #tpu.memory_space<vmem>>, vector<128x128xf32>
    %cst_51 = arith.constant dense<0.000000e+00> : vector<8x128xf32>
    %65 = tpu.matmul %63, %64, %cst_51 {dimension_numbers = #tpu.dot_dimension_numbers<[1], [0], [0], [1], [0, 0, 1, 1], [], []>} : vector<8x128xf32>, vector<128x128xf32>, vector<8x128xf32> -> vector<8x128xf32>
    %c0_52 = arith.constant 0 : index
    %c0_53 = arith.constant 0 : index
    %66 = vector.load %arg18[%c0_52, %c0_53] : memref<1x128xf32, #tpu.memory_space<vmem>>, vector<1x128xf32>
    %67 = vector.broadcast %66 : vector<1x128xf32> to vector<8x128xf32>
    %68 = arith.mulf %65, %67 : vector<8x128xf32>
    %c0_54 = arith.constant 0 : index
    %c0_55 = arith.constant 0 : index
    %69 = vector.load %arg19[%c0_54, %c0_55] : memref<1x128xf32, #tpu.memory_space<vmem>>, vector<1x128xf32>
    %70 = vector.broadcast %69 : vector<1x128xf32> to vector<8x128xf32>
    %71 = arith.addf %68, %70 : vector<8x128xf32>
    %cst_56 = arith.constant 0.000000e+00 : f32
    %72 = vector.broadcast %cst_56 : f32 to vector<8x128xf32>
    %73 = arith.maximumf %71, %72 : vector<8x128xf32>
    %c0_57 = arith.constant 0 : index
    %c0_58 = arith.constant 0 : index
    %74 = vector.load %arg20[%c0_57, %c0_58] : memref<128x128xf32, #tpu.memory_space<vmem>>, vector<128x128xf32>
    %cst_59 = arith.constant dense<0.000000e+00> : vector<8x128xf32>
    %75 = tpu.matmul %73, %74, %cst_59 {dimension_numbers = #tpu.dot_dimension_numbers<[1], [0], [0], [1], [0, 0, 1, 1], [], []>} : vector<8x128xf32>, vector<128x128xf32>, vector<8x128xf32> -> vector<8x128xf32>
    %c0_60 = arith.constant 0 : index
    %c0_61 = arith.constant 0 : index
    %76 = vector.load %arg21[%c0_60, %c0_61] : memref<1x128xf32, #tpu.memory_space<vmem>>, vector<1x128xf32>
    %77 = vector.broadcast %76 : vector<1x128xf32> to vector<8x128xf32>
    %78 = arith.mulf %75, %77 : vector<8x128xf32>
    %c0_62 = arith.constant 0 : index
    %c0_63 = arith.constant 0 : index
    %79 = vector.load %arg22[%c0_62, %c0_63] : memref<1x128xf32, #tpu.memory_space<vmem>>, vector<1x128xf32>
    %80 = vector.broadcast %79 : vector<1x128xf32> to vector<8x128xf32>
    %81 = arith.addf %78, %80 : vector<8x128xf32>
    %cst_64 = arith.constant dense<0xFF800000> : vector<8xf32>
    %82 = vector.multi_reduction <maximumf>, %81, %cst_64 [1] : vector<8x128xf32> to vector<8xf32>
    %83 = vector.shape_cast %82 : vector<8xf32> to vector<8x1xf32>
    %84 = vector.broadcast %83 : vector<8x1xf32> to vector<8x128xf32>
    %85 = arith.subf %81, %84 : vector<8x128xf32>
    %86 = math.exp %85 : vector<8x128xf32>
    %cst_65 = arith.constant dense<0.000000e+00> : vector<8xf32>
    %87 = vector.multi_reduction <add>, %86, %cst_65 [1] : vector<8x128xf32> to vector<8xf32>
    %88 = vector.shape_cast %87 : vector<8xf32> to vector<8x1xf32>
    %89 = tpu.reciprocal %88 {approx = true} : vector<8x1xf32> -> vector<8x1xf32>
    %90 = vector.broadcast %89 : vector<8x1xf32> to vector<8x128xf32>
    %91 = arith.mulf %86, %90 : vector<8x128xf32>
    %c0_66 = arith.constant 0 : index
    %c0_67 = arith.constant 0 : index
    %92 = vector.load %arg26[%c0_66, %c0_67] : memref<8x128xf32, #tpu.memory_space<vmem>>, vector<8x128xf32>
    tpu.vector_store %arg26[%c0_66, %c0_67], %91 {strides = array<i32>} : memref<8x128xf32, #tpu.memory_space<vmem>>, vector<8x128xf32>,
    return
  }
}

</mosaic_0001>

<llo_original>
// kernel: single_sparse_infer.1
$region0: #{single_sparse_infer.1}
  #allocation0 [shape = 'u32[]', space=smem, size = 0x4, offset = 0x4, fixed_abs, tag = 'smem constant byte address 0x4 - core index']
  #allocation1 [shape = 'u32[144,128]{1,0:T(1,128)}', space=vmem, size = 0x12000, scoped, tag = 'internal scratch']
  %s0 = inlined_call_operand.vmem [shape: f32[8,128], index: 0, kind: input, shape index: {}]
  %s1 = inlined_call_operand.vmem [shape: f32[8,128], index: 1, kind: input, shape index: {}]
  %s2 = inlined_call_operand.hbm [shape: f32[128,128], index: 2, kind: input, shape index: {}]
  %s3 = inlined_call_operand.vmem [shape: f32[1,128], index: 3, kind: input, shape index: {}]
  %s4 = inlined_call_operand.vmem [shape: f32[1,128], index: 4, kind: input, shape index: {}]
  %s5 = inlined_call_operand.hbm [shape: f32[128,256], index: 5, kind: input, shape index: {}]
  %s6 = inlined_call_operand.vmem [shape: f32[1,256], index: 6, kind: input, shape index: {}]
  %s7 = inlined_call_operand.vmem [shape: f32[1,256], index: 7, kind: input, shape index: {}]
  %s8 = inlined_call_operand.hbm [shape: f32[128,128], index: 8, kind: input, shape index: {}]
  %s9 = inlined_call_operand.vmem [shape: f32[1,128], index: 9, kind: input, shape index: {}]
  %s10 = inlined_call_operand.vmem [shape: f32[1,128], index: 10, kind: input, shape index: {}]
  %s11 = inlined_call_operand.hbm [shape: f32[128,128], index: 11, kind: input, shape index: {}]
  %s12 = inlined_call_operand.vmem [shape: f32[1,128], index: 12, kind: input, shape index: {}]
  %s13 = inlined_call_operand.vmem [shape: f32[1,128], index: 13, kind: input, shape index: {}]
  %s14 = inlined_call_operand.hbm [shape: f32[128,128], index: 14, kind: input, shape index: {}]
  %s15 = inlined_call_operand.vmem [shape: f32[1,128], index: 15, kind: input, shape index: {}]
  %s16 = inlined_call_operand.vmem [shape: f32[1,128], index: 16, kind: input, shape index: {}]
  %s17 = inlined_call_operand.hbm [shape: f32[128,128], index: 17, kind: input, shape index: {}]
  %s18 = inlined_call_operand.vmem [shape: f32[1,128], index: 18, kind: input, shape index: {}]
  %s19 = inlined_call_operand.vmem [shape: f32[1,128], index: 19, kind: input, shape index: {}]
  %s20 = inlined_call_operand.hbm [shape: f32[128,128], index: 20, kind: input, shape index: {}]
  %s21 = inlined_call_operand.vmem [shape: f32[1,128], index: 21, kind: input, shape index: {}]
  %s22 = inlined_call_operand.vmem [shape: f32[1,128], index: 22, kind: input, shape index: {}]
  %s23 = inlined_call_operand.hbm [shape: f32[8,128], index: 23, kind: output, shape index: {0}]
  %s24 = inlined_call_operand.hbm [shape: f32[8,128], index: 24, kind: output, shape index: {1}]
  %s25 = inlined_call_operand.hbm [shape: f32[8,128], index: 25, kind: output, shape index: {2}]
  %s26 = inlined_call_operand.vmem [shape: f32[8,128], index: 26, kind: output, shape index: {3}]
  %27 = xla_tuple %s23, %s24, %s25, %s26
  %s28 = sld [smem:[#allocation0]]
  $region154: #{single_sparse_infer.1} parent=0
    _
  %s30 = ssub.s32 1, %s28
  %s31 = scalar_select 0, %s30, %s28
  $region1: #{single_sparse_infer.1} parent=0
    #allocation2 [shape = 'u8[65536]{0}', space=vmem, size = 0x10000, scoped, tag = 'input window, operand 2, single buffered']
    #allocation3 [shape = 's32[1]{0}', space=sflag, size = 0x4, scoped, tag = 'scoped memory for single_sparse_infer.1']
    #allocation4 [shape = 's32[1]{0}', space=sflag, size = 0x4, scoped, tag = 'scoped memory for single_sparse_infer.1']
    #allocation5 [shape = 'u8[131072]{0}', space=vmem, size = 0x20000, scoped, tag = 'input window, operand 5, single buffered']
    #allocation6 [shape = 's32[1]{0}', space=sflag, size = 0x4, scoped, tag = 'scoped memory for single_sparse_infer.1']
    #allocation7 [shape = 'u8[65536]{0}', space=vmem, size = 0x10000, scoped, tag = 'input window, operand 8, single buffered']
    #allocation8 [shape = 'u8[65536]{0}', space=vmem, size = 0x10000, scoped, tag = 'input window, operand 11, single buffered']
    #allocation9 [shape = 's32[1]{0}', space=sflag, size = 0x4, scoped, tag = 'scoped memory for single_sparse_infer.1']
    #allocation10 [shape = 'u8[65536]{0}', space=vmem, size = 0x10000, scoped, tag = 'input window, operand 14, single buffered']
    #allocation11 [shape = 'u8[65536]{0}', space=vmem, size = 0x10000, scoped, tag = 'input window, operand 17, single buffered']
    #allocation12 [shape = 's32[1]{0}', space=sflag, size = 0x4, scoped, tag = 'scoped memory for single_sparse_infer.1']
    #allocation13 [shape = 'u8[65536]{0}', space=vmem, size = 0x10000, scoped, tag = 'input window, operand 20, single buffered']
    #allocation14 [shape = 'u8[4096]{0}', space=vmem, size = 0x1000, scoped, tag = 'output window, operand 0, single buffered']
    #allocation15 [shape = 'u8[4096]{0}', space=vmem, size = 0x1000, scoped, tag = 'output window, operand 1, single buffered']
    #allocation16 [shape = 's32[1]{0}', space=sflag, size = 0x4, scoped, tag = 'scoped memory for single_sparse_infer.1']
    #allocation17 [shape = 'u8[4096]{0}', space=vmem, size = 0x1000, scoped, tag = 'output window, operand 2, single buffered']
    %32 = vsyncpa [#allocation3], 0
    %33 = vsyncpa [#allocation6], 0
    %34 = vsyncpa [#allocation9], 0
    %35 = vsyncpa [#allocation12], 0
    %36 = vsyncpa [#allocation4], 0
    %37 = vsyncpa [#allocation16], 0
    // Predicated region
    $region2: #{single_sparse_infer.1} parent=1 // pred_check
      _
    $region3: #{single_sparse_infer.1} parent=1 // pred_check_branch
      %39 = sbr.rel (0) target = $region5
    $region4: #{single_sparse_infer.1} parent=1 // pred_region
      _
    $region5: #{single_sparse_infer.1} parent=1 // pred_fallthru
      _
    // Predicated region
    $region6: #{single_sparse_infer.1} parent=1 // pred_check
      _
    $region7: #{single_sparse_infer.1} parent=1 // pred_check_branch
      %41 = sbr.rel (0) target = $region9
    $region8: #{single_sparse_infer.1} parent=1 // pred_region
      _
    $region9: #{single_sparse_infer.1} parent=1 // pred_fallthru
      _
    // Predicated region
    $region10: #{single_sparse_infer.1} parent=1 // pred_check
      _
    $region11: #{single_sparse_infer.1} parent=1 // pred_check_branch
      %43 = sbr.rel (0) target = $region13
    $region12: #{single_sparse_infer.1} parent=1 // pred_region
      %s45 = ssub.s32 2048, 2048
      %46 = vsyncadd [#allocation3], %s45
      %s47 = sshll.u32 [#allocation2], 4
      %s48 = int_to_ptr.vmem [resolvable:$true] %s47
      %53 = dma.hbm_to_vmem [thread:$0]  %s2, 2048, %s48, [#allocation3], 128, 128, 8
    $region13: #{single_sparse_infer.1} parent=1 // pred_fallthru
      _
    // Predicated region
    $region14: #{single_sparse_infer.1} parent=1 // pred_check
      _
    $region15: #{single_sparse_infer.1} parent=1 // pred_check_branch
      %55 = sbr.rel (0) target = $region17
    $region16: #{single_sparse_infer.1} parent=1 // pred_region
      _
    $region17: #{single_sparse_infer.1} parent=1 // pred_fallthru
      _
    // Predicated region
    $region18: #{single_sparse_infer.1} parent=1 // pred_check
      _
    $region19: #{single_sparse_infer.1} parent=1 // pred_check_branch
      %57 = sbr.rel (0) target = $region21
    $region20: #{single_sparse_infer.1} parent=1 // pred_region
      _
    $region21: #{single_sparse_infer.1} parent=1 // pred_fallthru
      _
    // Predicated region
    $region22: #{single_sparse_infer.1} parent=1 // pred_check
      _
    $region23: #{single_sparse_infer.1} parent=1 // pred_check_branch
      %59 = sbr.rel (0) target = $region25
    $region24: #{single_sparse_infer.1} parent=1 // pred_region
      %s61 = ssub.s32 4096, 4096
      %62 = vsyncadd [#allocation6], %s61
      %s63 = sshll.u32 [#allocation5], 4
      %s64 = int_to_ptr.vmem [resolvable:$true] %s63
      %69 = dma.hbm_to_vmem [thread:$0]  %s5, 4096, %s64, [#allocation6], 256, 256, 16
    $region25: #{single_sparse_infer.1} parent=1 // pred_fallthru
      _
    // Predicated region
    $region26: #{single_sparse_infer.1} parent=1 // pred_check
      _
    $region27: #{single_sparse_infer.1} parent=1 // pred_check_branch
      %71 = sbr.rel (0) target = $region29
    $region28: #{single_sparse_infer.1} parent=1 // pred_region
      _
    $region29: #{single_sparse_infer.1} parent=1 // pred_fallthru
      _
    // Predicated region
    $region30: #{single_sparse_infer.1} parent=1 // pred_check
      _
    $region31: #{single_sparse_infer.1} parent=1 // pred_check_branch
      %73 = sbr.rel (0) target = $region33
    $region32: #{single_sparse_infer.1} parent=1 // pred_region
      _
    $region33: #{single_sparse_infer.1} parent=1 // pred_fallthru
      _
    // Predicated region
    $region34: #{single_sparse_infer.1} parent=1 // pred_check
      _
    $region35: #{single_sparse_infer.1} parent=1 // pred_check_branch
      %75 = sbr.rel (0) target = $region37
    $region36: #{single_sparse_infer.1} parent=1 // pred_region
      %s77 = ssub.s32 2048, 2048
      %78 = vsyncadd [#allocation6], %s77
      %s79 = sshll.u32 [#allocation7], 4
      %s80 = int_to_ptr.vmem [resolvable:$true] %s79
      %85 = dma.hbm_to_vmem [thread:$0]  %s8, 2048, %s80, [#allocation6], 128, 128, 8
    $region37: #{single_sparse_infer.1} parent=1 // pred_fallthru
      _
    // Predicated region
    $region38: #{single_sparse_infer.1} parent=1 // pred_check
      _
    $region39: #{single_sparse_infer.1} parent=1 // pred_check_branch
      %87 = sbr.rel (0) target = $region41
    $region40: #{single_sparse_infer.1} parent=1 // pred_region
      _
    $region41: #{single_sparse_infer.1} parent=1 // pred_fallthru
      _
    // Predicated region
    $region42: #{single_sparse_infer.1} parent=1 // pred_check
      _
    $region43: #{single_sparse_infer.1} parent=1 // pred_check_branch
      %89 = sbr.rel (0) target = $region45
    $region44: #{single_sparse_infer.1} parent=1 // pred_region
      _
    $region45: #{single_sparse_infer.1} parent=1 // pred_fallthru
      _
    // Predicated region
    $region46: #{single_sparse_infer.1} parent=1 // pred_check
      _
    $region47: #{single_sparse_infer.1} parent=1 // pred_check_branch
      %91 = sbr.rel (0) target = $region49
    $region48: #{single_sparse_infer.1} parent=1 // pred_region
      %s93 = ssub.s32 2048, 2048
      %94 = vsyncadd [#allocation9], %s93
      %s95 = sshll.u32 [#allocation8], 4
      %s96 = int_to_ptr.vmem [resolvable:$true] %s95
      %101 = dma.hbm_to_vmem [thread:$0]  %s11, 2048, %s96, [#allocation9], 128, 128, 8
    $region49: #{single_sparse_infer.1} parent=1 // pred_fallthru
      _
    // Predicated region
    $region50: #{single_sparse_infer.1} parent=1 // pred_check
      _
    $region51: #{single_sparse_infer.1} parent=1 // pred_check_branch
      %103 = sbr.rel (0) target = $region53
    $region52: #{single_sparse_infer.1} parent=1 // pred_region
      _
    $region53: #{single_sparse_infer.1} parent=1 // pred_fallthru
      _
    // Predicated region
    $region54: #{single_sparse_infer.1} parent=1 // pred_check
      _
    $region55: #{single_sparse_infer.1} parent=1 // pred_check_branch
      %105 = sbr.rel (0) target = $region57
    $region56: #{single_sparse_infer.1} parent=1 // pred_region
      _
    $region57: #{single_sparse_infer.1} parent=1 // pred_fallthru
      _
    // Predicated region
    $region58: #{single_sparse_infer.1} parent=1 // pred_check
      _
    $region59: #{single_sparse_infer.1} parent=1 // pred_check_branch
      %107 = sbr.rel (0) target = $region61
    $region60: #{single_sparse_infer.1} parent=1 // pred_region
      %s109 = ssub.s32 2048, 2048
      %110 = vsyncadd [#allocation9], %s109
      %s111 = sshll.u32 [#allocation10], 4
      %s112 = int_to_ptr.vmem [resolvable:$true] %s111
      %117 = dma.hbm_to_vmem [thread:$0]  %s14, 2048, %s112, [#allocation9], 128, 128, 8
    $region61: #{single_sparse_infer.1} parent=1 // pred_fallthru
      _
    // Predicated region
    $region62: #{single_sparse_infer.1} parent=1 // pred_check
      _
    $region63: #{single_sparse_infer.1} parent=1 // pred_check_branch
      %119 = sbr.rel (0) target = $region65
    $region64: #{single_sparse_infer.1} parent=1 // pred_region
      _
    $region65: #{single_sparse_infer.1} parent=1 // pred_fallthru
      _
    // Predicated region
    $region66: #{single_sparse_infer.1} parent=1 // pred_check
      _
    $region67: #{single_sparse_infer.1} parent=1 // pred_check_branch
      %121 = sbr.rel (0) target = $region69
    $region68: #{single_sparse_infer.1} parent=1 // pred_region
      _
    $region69: #{single_sparse_infer.1} parent=1 // pred_fallthru
      _
    // Predicated region
    $region70: #{single_sparse_infer.1} parent=1 // pred_check
      _
    $region71: #{single_sparse_infer.1} parent=1 // pred_check_branch
      %123 = sbr.rel (0) target = $region73
    $region72: #{single_sparse_infer.1} parent=1 // pred_region
      %s125 = ssub.s32 2048, 2048
      %126 = vsyncadd [#allocation12], %s125
      %s127 = sshll.u32 [#allocation11], 4
      %s128 = int_to_ptr.vmem [resolvable:$true] %s127
      %133 = dma.hbm_to_vmem [thread:$0]  %s17, 2048, %s128, [#allocation12], 128, 128, 8
    $region73: #{single_sparse_infer.1} parent=1 // pred_fallthru
      _
    // Predicated region
    $region74: #{single_sparse_infer.1} parent=1 // pred_check
      _
    $region75: #{single_sparse_infer.1} parent=1 // pred_check_branch
      %135 = sbr.rel (0) target = $region77
    $region76: #{single_sparse_infer.1} parent=1 // pred_region
      _
    $region77: #{single_sparse_infer.1} parent=1 // pred_fallthru
      _
    // Predicated region
    $region78: #{single_sparse_infer.1} parent=1 // pred_check
      _
    $region79: #{single_sparse_infer.1} parent=1 // pred_check_branch
      %137 = sbr.rel (0) target = $region81
    $region80: #{single_sparse_infer.1} parent=1 // pred_region
      _
    $region81: #{single_sparse_infer.1} parent=1 // pred_fallthru
      _
    // Predicated region
    $region82: #{single_sparse_infer.1} parent=1 // pred_check
      _
    $region83: #{single_sparse_infer.1} parent=1 // pred_check_branch
      %139 = sbr.rel (0) target = $region85
    $region84: #{single_sparse_infer.1} parent=1 // pred_region
      %s141 = ssub.s32 2048, 2048
      %142 = vsyncadd [#allocation12], %s141
      %s143 = sshll.u32 [#allocation13], 4
      %s144 = int_to_ptr.vmem [resolvable:$true] %s143
      %149 = dma.hbm_to_vmem [thread:$0]  %s20, 2048, %s144, [#allocation12], 128, 128, 8
    $region85: #{single_sparse_infer.1} parent=1 // pred_fallthru
      _
    // Predicated region
    $region86: #{single_sparse_infer.1} parent=1 // pred_check
      _
    $region87: #{single_sparse_infer.1} parent=1 // pred_check_branch
      %151 = sbr.rel (0) target = $region89
    $region88: #{single_sparse_infer.1} parent=1 // pred_region
      _
    $region89: #{single_sparse_infer.1} parent=1 // pred_fallthru
      _
    // Predicated region
    $region90: #{single_sparse_infer.1} parent=1 // pred_check
      _
    $region91: #{single_sparse_infer.1} parent=1 // pred_check_branch
      %153 = sbr.rel (0) target = $region93
    $region92: #{single_sparse_infer.1} parent=1 // pred_region
      _
    $region93: #{single_sparse_infer.1} parent=1 // pred_fallthru
      _
    // Predicated region
    $region94: #{single_sparse_infer.1} parent=1 // pred_check
      _
    $region95: #{single_sparse_infer.1} parent=1 // pred_check_branch
      %155 = sbr.rel (0) target = $region97
    $region96: #{single_sparse_infer.1} parent=1 // pred_region
      %156 = dma.done [#allocation3], 2048
    $region97: #{single_sparse_infer.1} parent=1 // pred_fallthru
      _
    // Predicated region
    $region98: #{single_sparse_infer.1} parent=1 // pred_check
      _
    $region99: #{single_sparse_infer.1} parent=1 // pred_check_branch
      %158 = sbr.rel (0) target = $region101
    $region100: #{single_sparse_infer.1} parent=1 // pred_region
      %159 = dma.done [#allocation6], 4096
    $region101: #{single_sparse_infer.1} parent=1 // pred_fallthru
      _
    // Predicated region
    $region102: #{single_sparse_infer.1} parent=1 // pred_check
      _
    $region103: #{single_sparse_infer.1} parent=1 // pred_check_branch
      %161 = sbr.rel (0) target = $region105
    $region104: #{single_sparse_infer.1} parent=1 // pred_region
      %162 = dma.done [#allocation6], 2048
    $region105: #{single_sparse_infer.1} parent=1 // pred_fallthru
      _
    // Predicated region
    $region106: #{single_sparse_infer.1} parent=1 // pred_check
      _
    $region107: #{single_sparse_infer.1} parent=1 // pred_check_branch
      %164 = sbr.rel (0) target = $region109
    $region108: #{single_sparse_infer.1} parent=1 // pred_region
      %165 = dma.done [#allocation9], 2048
    $region109: #{single_sparse_infer.1} parent=1 // pred_fallthru
      _
    // Predicated region
    $region110: #{single_sparse_infer.1} parent=1 // pred_check
      _
    $region111: #{single_sparse_infer.1} parent=1 // pred_check_branch
      %167 = sbr.rel (0) target = $region113
    $region112: #{single_sparse_infer.1} parent=1 // pred_region
      %168 = dma.done [#allocation9], 2048
    $region113: #{single_sparse_infer.1} parent=1 // pred_fallthru
      _
    // Predicated region
    $region114: #{single_sparse_infer.1} parent=1 // pred_check
      _
    $region115: #{single_sparse_infer.1} parent=1 // pred_check_branch
      %170 = sbr.rel (0) target = $region117
    $region116: #{single_sparse_infer.1} parent=1 // pred_region
      %171 = dma.done [#allocation12], 2048
    $region117: #{single_sparse_infer.1} parent=1 // pred_fallthru
      _
    // Predicated region
    $region118: #{single_sparse_infer.1} parent=1 // pred_check
      _
    $region119: #{single_sparse_infer.1} parent=1 // pred_check_branch
      %173 = sbr.rel (0) target = $region121
    $region120: #{single_sparse_infer.1} parent=1 // pred_region
      %174 = dma.done [#allocation12], 2048
    $region121: #{single_sparse_infer.1} parent=1 // pred_fallthru
      _
    %v175 = vld [vmem:[%s0] sm:$0xff]
    %v176 = vld [vmem:[#allocation2] sm:$0xff]
    %v177 = vld [vmem:[#allocation2 + $0x8] sm:$0xff]
    %v178 = vld [vmem:[#allocation2 + $0x10] sm:$0xff]
    %v179 = vld [vmem:[#allocation2 + $0x18] sm:$0xff]
    %v180 = vld [vmem:[#allocation2 + $0x20] sm:$0xff]
    %v181 = vld [vmem:[#allocation2 + $0x28] sm:$0xff]
    %v182 = vld [vmem:[#allocation2 + $0x30] sm:$0xff]
    %v183 = vld [vmem:[#allocation2 + $0x38] sm:$0xff]
    %v184 = vld [vmem:[#allocation2 + $0x40] sm:$0xff]
    %v185 = vld [vmem:[#allocation2 + $0x48] sm:$0xff]
    %v186 = vld [vmem:[#allocation2 + $0x50] sm:$0xff]
    %v187 = vld [vmem:[#allocation2 + $0x58] sm:$0xff]
    %v188 = vld [vmem:[#allocation2 + $0x60] sm:$0xff]
    %v189 = vld [vmem:[#allocation2 + $0x68] sm:$0xff]
    %v190 = vld [vmem:[#allocation2 + $0x70] sm:$0xff]
    %v191 = vld [vmem:[#allocation2 + $0x78] sm:$0xff]
    %192 = vmatprep.subr.mxu0 0.0
    %193 = vmatpush1.msra.mxu0 %v191
    %194 = vmatprep.subr.mxu0 0.0
    %195 = vmatpush1.msra.mxu0 %v190
    %196 = vmatprep.subr.mxu0 0.0
    %197 = vmatpush1.msra.mxu0 %v189
    %198 = vmatprep.subr.mxu0 0.0
    %199 = vmatpush1.msra.mxu0 %v188
    %200 = vmatprep.subr.mxu0 0.0
    %201 = vmatpush1.msra.mxu0 %v187
    %202 = vmatprep.subr.mxu0 0.0
    %203 = vmatpush1.msra.mxu0 %v186
    %204 = vmatprep.subr.mxu0 0.0
    %205 = vmatpush1.msra.mxu0 %v185
    %206 = vmatprep.subr.mxu0 0.0
    %207 = vmatpush1.msra.mxu0 %v184
    %208 = vmatprep.subr.mxu0 0.0
    %209 = vmatpush1.msra.mxu0 %v183
    %210 = vmatprep.subr.mxu0 0.0
    %211 = vmatpush1.msra.mxu0 %v182
    %212 = vmatprep.subr.mxu0 0.0
    %213 = vmatpush1.msra.mxu0 %v181
    %214 = vmatprep.subr.mxu0 0.0
    %215 = vmatpush1.msra.mxu0 %v180
    %216 = vmatprep.subr.mxu0 0.0
    %217 = vmatpush1.msra.mxu0 %v179
    %218 = vmatprep.subr.mxu0 0.0
    %219 = vmatpush1.msra.mxu0 %v178
    %220 = vmatprep.subr.mxu0 0.0
    %221 = vmatpush1.msra.mxu0 %v177
    %222 = vmatprep.subr.mxu0 0.0
    %223 = vmatpush1.msra.mxu0 %v176
    %224 = vmatprep.subr.mxu0 0.0
    %225 = vmatpush2.msra.mxu0 0.0
    %226 = vmatprep.subr.mxu0 0.0
    %227 = vmatpush2.msra.mxu0 0.0
    %228 = vmatprep.subr.mxu0 0.0
    %229 = vmatpush2.msra.mxu0 0.0
    %230 = vmatprep.subr.mxu0 0.0
    %231 = vmatpush2.msra.mxu0 0.0
    %232 = vmatprep.subr.mxu0 0.0
    %233 = vmatpush2.msra.mxu0 0.0
    %234 = vmatprep.subr.mxu0 0.0
    %235 = vmatpush2.msra.mxu0 0.0
    %236 = vmatprep.subr.mxu0 0.0
    %237 = vmatpush2.msra.mxu0 0.0
    %238 = vmatprep.subr.mxu0 0.0
    %239 = vmatpush2.msra.mxu0 0.0
    %240 = vmatprep.subr.mxu0 0.0
    %241 = vmatpush2.msra.mxu0 0.0
    %242 = vmatprep.subr.mxu0 0.0
    %243 = vmatpush2.msra.mxu0 0.0
    %244 = vmatprep.subr.mxu0 0.0
    %245 = vmatpush2.msra.mxu0 0.0
    %246 = vmatprep.subr.mxu0 0.0
    %247 = vmatpush2.msra.mxu0 0.0
    %248 = vmatprep.subr.mxu0 0.0
    %249 = vmatpush2.msra.mxu0 0.0
    %250 = vmatprep.subr.mxu0 0.0
    %251 = vmatpush2.msra.mxu0 0.0
    %252 = vmatprep.subr.mxu0 0.0
    %253 = vmatpush2.msra.mxu0 0.0
    %254 = vmatprep.subr.mxu0 0.0
    %255 = vmatpush2.msra.mxu0 0.0
    %256 = vmatprep.mubr.f32.mxu0 0.0
    %257 = vmatmul.mubr.f32.gmra.mxu0 %v175
    %v258 = vpop.f32.mrf.mxu0
    %v259 = vadd.f32 0.0, %v258
    %v260 = vpop.f32.mrf.mxu0
    %261 = vdwg.mxu0
    %v262 = vld [vmem:[%s3] sm:$0x1]
    %v264 = vlaneseq
    %v265 = vshrl.u32 %v264, 7
    %v266 = vsub.s32 0, %v265
    %v267 = vrot.slane %v262, %v266
    %v269 = vmul.f32 %v259, %v267
    %v270 = vld [vmem:[%s4] sm:$0x1]
    %v272 = vlaneseq
    %v273 = vshrl.u32 %v272, 7
    %v274 = vsub.s32 0, %v273
    %v275 = vrot.slane %v270, %v274
    %v277 = vadd.f32 %v269, %v275
    %v278 = vmax.f32 %v277, 0.0
    %v279 = vld [vmem:[#allocation5] sm:$0xff]
    %v280 = vld [vmem:[#allocation5 + $0x8] sm:$0xff]
    %v281 = vld [vmem:[#allocation5 + $0x10] sm:$0xff]
    %v282 = vld [vmem:[#allocation5 + $0x18] sm:$0xff]
    %v283 = vld [vmem:[#allocation5 + $0x20] sm:$0xff]
    %v284 = vld [vmem:[#allocation5 + $0x28] sm:$0xff]
    %v285 = vld [vmem:[#allocation5 + $0x30] sm:$0xff]
    %v286 = vld [vmem:[#allocation5 + $0x38] sm:$0xff]
    %v287 = vld [vmem:[#allocation5 + $0x40] sm:$0xff]
    %v288 = vld [vmem:[#allocation5 + $0x48] sm:$0xff]
    %v289 = vld [vmem:[#allocation5 + $0x50] sm:$0xff]
    %v290 = vld [vmem:[#allocation5 + $0x58] sm:$0xff]
    %v291 = vld [vmem:[#allocation5 + $0x60] sm:$0xff]
    %v292 = vld [vmem:[#allocation5 + $0x68] sm:$0xff]
    %v293 = vld [vmem:[#allocation5 + $0x70] sm:$0xff]
    %v294 = vld [vmem:[#allocation5 + $0x78] sm:$0xff]
    %v295 = vld [vmem:[#allocation5 + $0x80] sm:$0xff]
    %v296 = vld [vmem:[#allocation5 + $0x88] sm:$0xff]
    %v297 = vld [vmem:[#allocation5 + $0x90] sm:$0xff]
    %v298 = vld [vmem:[#allocation5 + $0x98] sm:$0xff]
    %v299 = vld [vmem:[#allocation5 + $0xa0] sm:$0xff]
    %v300 = vld [vmem:[#allocation5 + $0xa8] sm:$0xff]
    %v301 = vld [vmem:[#allocation5 + $0xb0] sm:$0xff]
    %v302 = vld [vmem:[#allocation5 + $0xb8] sm:$0xff]
    %v303 = vld [vmem:[#allocation5 + $0xc0] sm:$0xff]
    %v304 = vld [vmem:[#allocation5 + $0xc8] sm:$0xff]
    %v305 = vld [vmem:[#allocation5 + $0xd0] sm:$0xff]
    %v306 = vld [vmem:[#allocation5 + $0xd8] sm:$0xff]
    %v307 = vld [vmem:[#allocation5 + $0xe0] sm:$0xff]
    %v308 = vld [vmem:[#allocation5 + $0xe8] sm:$0xff]
    %v309 = vld [vmem:[#allocation5 + $0xf0] sm:$0xff]
    %v310 = vld [vmem:[#allocation5 + $0xf8] sm:$0xff]
    %311 = vmatprep.subr.mxu0 %v310
    %312 = vmatpush1.msra.mxu0 %v309
    %313 = vmatprep.subr.mxu0 %v308
    %314 = vmatpush1.msra.mxu0 %v307
    %315 = vmatprep.subr.mxu0 %v306
    %316 = vmatpush1.msra.mxu0 %v305
    %317 = vmatprep.subr.mxu0 %v304
    %318 = vmatpush1.msra.mxu0 %v303
    %319 = vmatprep.subr.mxu0 %v302
    %320 = vmatpush1.msra.mxu0 %v301
    %321 = vmatprep.subr.mxu0 %v300
    %322 = vmatpush1.msra.mxu0 %v299
    %323 = vmatprep.subr.mxu0 %v298
    %324 = vmatpush1.msra.mxu0 %v297
    %325 = vmatprep.subr.mxu0 %v296
    %326 = vmatpush1.msra.mxu0 %v295
    %327 = vmatprep.subr.mxu0 %v294
    %328 = vmatpush1.msra.mxu0 %v293
    %329 = vmatprep.subr.mxu0 %v292
    %330 = vmatpush1.msra.mxu0 %v291
    %331 = vmatprep.subr.mxu0 %v290
    %332 = vmatpush1.msra.mxu0 %v289
    %333 = vmatprep.subr.mxu0 %v288
    %334 = vmatpush1.msra.mxu0 %v287
    %335 = vmatprep.subr.mxu0 %v286
    %336 = vmatpush1.msra.mxu0 %v285
    %337 = vmatprep.subr.mxu0 %v284
    %338 = vmatpush1.msra.mxu0 %v283
    %339 = vmatprep.subr.mxu0 %v282
    %340 = vmatpush1.msra.mxu0 %v281
    %341 = vmatprep.subr.mxu0 %v280
    %342 = vmatpush1.msra.mxu0 %v279
    %343 = vmatprep.subr.mxu0 0.0
    %344 = vmatpush2.msra.mxu0 0.0
    %345 = vmatprep.subr.mxu0 0.0
    %346 = vmatpush2.msra.mxu0 0.0
    %347 = vmatprep.subr.mxu0 0.0
    %348 = vmatpush2.msra.mxu0 0.0
    %349 = vmatprep.subr.mxu0 0.0
    %350 = vmatpush2.msra.mxu0 0.0
    %351 = vmatprep.subr.mxu0 0.0
    %352 = vmatpush2.msra.mxu0 0.0
    %353 = vmatprep.subr.mxu0 0.0
    %354 = vmatpush2.msra.mxu0 0.0
    %355 = vmatprep.subr.mxu0 0.0
    %356 = vmatpush2.msra.mxu0 0.0
    %357 = vmatprep.subr.mxu0 0.0
    %358 = vmatpush2.msra.mxu0 0.0
    %359 = vmatprep.subr.mxu0 0.0
    %360 = vmatpush2.msra.mxu0 0.0
    %361 = vmatprep.subr.mxu0 0.0
    %362 = vmatpush2.msra.mxu0 0.0
    %363 = vmatprep.subr.mxu0 0.0
    %364 = vmatpush2.msra.mxu0 0.0
    %365 = vmatprep.subr.mxu0 0.0
    %366 = vmatpush2.msra.mxu0 0.0
    %367 = vmatprep.subr.mxu0 0.0
    %368 = vmatpush2.msra.mxu0 0.0
    %369 = vmatprep.subr.mxu0 0.0
    %370 = vmatpush2.msra.mxu0 0.0
    %371 = vmatprep.subr.mxu0 0.0
    %372 = vmatpush2.msra.mxu0 0.0
    %373 = vmatprep.subr.mxu0 0.0
    %374 = vmatpush2.msra.mxu0 0.0
    %375 = vmatprep.mubr.f32.mxu0 0.0
    %376 = vmatmul.mubr.f32.gmra.mxu0 %v278
    %v377 = vpop.f32.mrf.mxu0
    %v378 = vadd.f32 0.0, %v377
    %v379 = vpop.f32.mrf.mxu0
    %v380 = vadd.f32 0.0, %v379
    %381 = vdwg.mxu0
    %v382 = vld [vmem:[%s6] sm:$0x3]
    %v384 = vlaneseq
    %v385 = vshrl.u32 %v384, 7
    %v386 = vsub.s32 0, %v385
    %v387 = vrot.slane %v382, %v386
    %v388 = vlaneseq
    %v389 = vshrl.u32 %v388, 7
    %v390 = vsub.s32 1, %v389
    %v391 = vrot.slane %v382, %v390
    %v394 = vmul.f32 %v378, %v387
    %v395 = vmul.f32 %v380, %v391
    %v396 = vld [vmem:[%s7] sm:$0x3]
    %v398 = vlaneseq
    %v399 = vshrl.u32 %v398, 7
    %v400 = vsub.s32 0, %v399
    %v401 = vrot.slane %v396, %v400
    %v402 = vlaneseq
    %v403 = vshrl.u32 %v402, 7
    %v404 = vsub.s32 1, %v403
    %v405 = vrot.slane %v396, %v404
    %v408 = vadd.f32 %v394, %v401
    %v409 = vadd.f32 %v395, %v405
    %410 = vst [vmem:[#allocation14] sm:$0xff] %v408
    %411 = vst [vmem:[#allocation15] sm:$0xff] %v409
    %v412 = vld [vmem:[%s1] sm:$0xff]
    %v413 = vmul.f32 %v409, 0.5
    %v414 = vmul.f32 %v413, 1.442695
    %v415 = vpow.pop %v414
    %v416 = vmul.f32 %v412, %v415
    %v417 = vadd.f32 %v408, %v416
    %v418 = vld [vmem:[#allocation7] sm:$0xff]
    %v419 = vld [vmem:[#allocation7 + $0x8] sm:$0xff]
    %v420 = vld [vmem:[#allocation7 + $0x10] sm:$0xff]
    %v421 = vld [vmem:[#allocation7 + $0x18] sm:$0xff]
    %v422 = vld [vmem:[#allocation7 + $0x20] sm:$0xff]
    %v423 = vld [vmem:[#allocation7 + $0x28] sm:$0xff]
    %v424 = vld [vmem:[#allocation7 + $0x30] sm:$0xff]
    %v425 = vld [vmem:[#allocation7 + $0x38] sm:$0xff]
    %v426 = vld [vmem:[#allocation7 + $0x40] sm:$0xff]
    %v427 = vld [vmem:[#allocation7 + $0x48] sm:$0xff]
    %v428 = vld [vmem:[#allocation7 + $0x50] sm:$0xff]
    %v429 = vld [vmem:[#allocation7 + $0x58] sm:$0xff]
    %v430 = vld [vmem:[#allocation7 + $0x60] sm:$0xff]
    %v431 = vld [vmem:[#allocation7 + $0x68] sm:$0xff]
    %v432 = vld [vmem:[#allocation7 + $0x70] sm:$0xff]
    %v433 = vld [vmem:[#allocation7 + $0x78] sm:$0xff]
    %434 = vmatprep.subr.mxu0 0.0
    %435 = vmatpush1.msra.mxu0 %v433
    %436 = vmatprep.subr.mxu0 0.0
    %437 = vmatpush1.msra.mxu0 %v432
    %438 = vmatprep.subr.mxu0 0.0
    %439 = vmatpush1.msra.mxu0 %v431
    %440 = vmatprep.subr.mxu0 0.0
    %441 = vmatpush1.msra.mxu0 %v430
    %442 = vmatprep.subr.mxu0 0.0
    %443 = vmatpush1.msra.mxu0 %v429
    %444 = vmatprep.subr.mxu0 0.0
    %445 = vmatpush1.msra.mxu0 %v428
    %446 = vmatprep.subr.mxu0 0.0
    %447 = vmatpush1.msra.mxu0 %v427
    %448 = vmatprep.subr.mxu0 0.0
    %449 = vmatpush1.msra.mxu0 %v426
    %450 = vmatprep.subr.mxu0 0.0
    %451 = vmatpush1.msra.mxu0 %v425
    %452 = vmatprep.subr.mxu0 0.0
    %453 = vmatpush1.msra.mxu0 %v424
    %454 = vmatprep.subr.mxu0 0.0
    %455 = vmatpush1.msra.mxu0 %v423
    %456 = vmatprep.subr.mxu0 0.0
    %457 = vmatpush1.msra.mxu0 %v422
    %458 = vmatprep.subr.mxu0 0.0
    %459 = vmatpush1.msra.mxu0 %v421
    %460 = vmatprep.subr.mxu0 0.0
    %461 = vmatpush1.msra.mxu0 %v420
    %462 = vmatprep.subr.mxu0 0.0
    %463 = vmatpush1.msra.mxu0 %v419
    %464 = vmatprep.subr.mxu0 0.0
    %465 = vmatpush1.msra.mxu0 %v418
    %466 = vmatprep.subr.mxu0 0.0
    %467 = vmatpush2.msra.mxu0 0.0
    %468 = vmatprep.subr.mxu0 0.0
    %469 = vmatpush2.msra.mxu0 0.0
    %470 = vmatprep.subr.mxu0 0.0
    %471 = vmatpush2.msra.mxu0 0.0
    %472 = vmatprep.subr.mxu0 0.0
    %473 = vmatpush2.msra.mxu0 0.0
    %474 = vmatprep.subr.mxu0 0.0
    %475 = vmatpush2.msra.mxu0 0.0
    %476 = vmatprep.subr.mxu0 0.0
    %477 = vmatpush2.msra.mxu0 0.0
    %478 = vmatprep.subr.mxu0 0.0
    %479 = vmatpush2.msra.mxu0 0.0
    %480 = vmatprep.subr.mxu0 0.0
    %481 = vmatpush2.msra.mxu0 0.0
    %482 = vmatprep.subr.mxu0 0.0
    %483 = vmatpush2.msra.mxu0 0.0
    %484 = vmatprep.subr.mxu0 0.0
    %485 = vmatpush2.msra.mxu0 0.0
    %486 = vmatprep.subr.mxu0 0.0
    %487 = vmatpush2.msra.mxu0 0.0
    %488 = vmatprep.subr.mxu0 0.0
    %489 = vmatpush2.msra.mxu0 0.0
    %490 = vmatprep.subr.mxu0 0.0
    %491 = vmatpush2.msra.mxu0 0.0
    %492 = vmatprep.subr.mxu0 0.0
    %493 = vmatpush2.msra.mxu0 0.0
    %494 = vmatprep.subr.mxu0 0.0
    %495 = vmatpush2.msra.mxu0 0.0
    %496 = vmatprep.subr.mxu0 0.0
    %497 = vmatpush2.msra.mxu0 0.0
    %498 = vmatprep.mubr.f32.mxu0 0.0
    %499 = vmatmul.mubr.f32.gmra.mxu0 %v417
    %v500 = vpop.f32.mrf.mxu0
    %v501 = vadd.f32 0.0, %v500
    %v502 = vpop.f32.mrf.mxu0
    %503 = vdwg.mxu0
    %v504 = vld [vmem:[%s9] sm:$0x1]
    %v506 = vlaneseq
    %v507 = vshrl.u32 %v506, 7
    %v508 = vsub.s32 0, %v507
    %v509 = vrot.slane %v504, %v508
    %v511 = vmul.f32 %v501, %v509
    %v512 = vld [vmem:[%s10] sm:$0x1]
    %v514 = vlaneseq
    %v515 = vshrl.u32 %v514, 7
    %v516 = vsub.s32 0, %v515
    %v517 = vrot.slane %v512, %v516
    %v519 = vadd.f32 %v511, %v517
    %v520 = vmax.f32 %v519, 0.0
    %v521 = vld [vmem:[#allocation8] sm:$0xff]
    %v522 = vld [vmem:[#allocation8 + $0x8] sm:$0xff]
    %v523 = vld [vmem:[#allocation8 + $0x10] sm:$0xff]
    %v524 = vld [vmem:[#allocation8 + $0x18] sm:$0xff]
    %v525 = vld [vmem:[#allocation8 + $0x20] sm:$0xff]
    %v526 = vld [vmem:[#allocation8 + $0x28] sm:$0xff]
    %v527 = vld [vmem:[#allocation8 + $0x30] sm:$0xff]
    %v528 = vld [vmem:[#allocation8 + $0x38] sm:$0xff]
    %v529 = vld [vmem:[#allocation8 + $0x40] sm:$0xff]
    %v530 = vld [vmem:[#allocation8 + $0x48] sm:$0xff]
    %v531 = vld [vmem:[#allocation8 + $0x50] sm:$0xff]
    %v532 = vld [vmem:[#allocation8 + $0x58] sm:$0xff]
    %v533 = vld [vmem:[#allocation8 + $0x60] sm:$0xff]
    %v534 = vld [vmem:[#allocation8 + $0x68] sm:$0xff]
    %v535 = vld [vmem:[#allocation8 + $0x70] sm:$0xff]
    %v536 = vld [vmem:[#allocation8 + $0x78] sm:$0xff]
    %537 = vmatprep.subr.mxu0 0.0
    %538 = vmatpush1.msra.mxu0 %v536
    %539 = vmatprep.subr.mxu0 0.0
    %540 = vmatpush1.msra.mxu0 %v535
    %541 = vmatprep.subr.mxu0 0.0
    %542 = vmatpush1.msra.mxu0 %v534
    %543 = vmatprep.subr.mxu0 0.0
    %544 = vmatpush1.msra.mxu0 %v533
    %545 = vmatprep.subr.mxu0 0.0
    %546 = vmatpush1.msra.mxu0 %v532
    %547 = vmatprep.subr.mxu0 0.0
    %548 = vmatpush1.msra.mxu0 %v531
    %549 = vmatprep.subr.mxu0 0.0
    %550 = vmatpush1.msra.mxu0 %v530
    %551 = vmatprep.subr.mxu0 0.0
    %552 = vmatpush1.msra.mxu0 %v529
    %553 = vmatprep.subr.mxu0 0.0
    %554 = vmatpush1.msra.mxu0 %v528
    %555 = vmatprep.subr.mxu0 0.0
    %556 = vmatpush1.msra.mxu0 %v527
    %557 = vmatprep.subr.mxu0 0.0
    %558 = vmatpush1.msra.mxu0 %v526
    %559 = vmatprep.subr.mxu0 0.0
    %560 = vmatpush1.msra.mxu0 %v525
    %561 = vmatprep.subr.mxu0 0.0
    %562 = vmatpush1.msra.mxu0 %v524
    %563 = vmatprep.subr.mxu0 0.0
    %564 = vmatpush1.msra.mxu0 %v523
    %565 = vmatprep.subr.mxu0 0.0
    %566 = vmatpush1.msra.mxu0 %v522
    %567 = vmatprep.subr.mxu0 0.0
    %568 = vmatpush1.msra.mxu0 %v521
    %569 = vmatprep.subr.mxu0 0.0
    %570 = vmatpush2.msra.mxu0 0.0
    %571 = vmatprep.subr.mxu0 0.0
    %572 = vmatpush2.msra.mxu0 0.0
    %573 = vmatprep.subr.mxu0 0.0
    %574 = vmatpush2.msra.mxu0 0.0
    %575 = vmatprep.subr.mxu0 0.0
    %576 = vmatpush2.msra.mxu0 0.0
    %577 = vmatprep.subr.mxu0 0.0
    %578 = vmatpush2.msra.mxu0 0.0
    %579 = vmatprep.subr.mxu0 0.0
    %580 = vmatpush2.msra.mxu0 0.0
    %581 = vmatprep.subr.mxu0 0.0
    %582 = vmatpush2.msra.mxu0 0.0
    %583 = vmatprep.subr.mxu0 0.0
    %584 = vmatpush2.msra.mxu0 0.0
    %585 = vmatprep.subr.mxu0 0.0
    %586 = vmatpush2.msra.mxu0 0.0
    %587 = vmatprep.subr.mxu0 0.0
    %588 = vmatpush2.msra.mxu0 0.0
    %589 = vmatprep.subr.mxu0 0.0
    %590 = vmatpush2.msra.mxu0 0.0
    %591 = vmatprep.subr.mxu0 0.0
    %592 = vmatpush2.msra.mxu0 0.0
    %593 = vmatprep.subr.mxu0 0.0
    %594 = vmatpush2.msra.mxu0 0.0
    %595 = vmatprep.subr.mxu0 0.0
    %596 = vmatpush2.msra.mxu0 0.0
    %597 = vmatprep.subr.mxu0 0.0
    %598 = vmatpush2.msra.mxu0 0.0
    %599 = vmatprep.subr.mxu0 0.0
    %600 = vmatpush2.msra.mxu0 0.0
    %601 = vmatprep.mubr.f32.mxu0 0.0
    %602 = vmatmul.mubr.f32.gmra.mxu0 %v520
    %v603 = vpop.f32.mrf.mxu0
    %v604 = vadd.f32 0.0, %v603
    %v605 = vpop.f32.mrf.mxu0
    %606 = vdwg.mxu0
    %v607 = vld [vmem:[%s12] sm:$0x1]
    %v609 = vlaneseq
    %v610 = vshrl.u32 %v609, 7
    %v611 = vsub.s32 0, %v610
    %v612 = vrot.slane %v607, %v611
    %v614 = vmul.f32 %v604, %v612
    %v615 = vld [vmem:[%s13] sm:$0x1]
    %v617 = vlaneseq
    %v618 = vshrl.u32 %v617, 7
    %v619 = vsub.s32 0, %v618
    %v620 = vrot.slane %v615, %v619
    %v622 = vadd.f32 %v614, %v620
    %v623 = vsub.f32 0.0, %v622
    %v624 = vmul.f32 %v623, 1.442695
    %v625 = vpow.pop %v624
    %v626 = vadd.f32 %v625, 1.0
    %v627 = vrcp.pop %v626
    %628 = vst [vmem:[#allocation17] sm:$0xff] %v627
    %v629 = vld [vmem:[#allocation10] sm:$0xff]
    %v630 = vld [vmem:[#allocation10 + $0x8] sm:$0xff]
    %v631 = vld [vmem:[#allocation10 + $0x10] sm:$0xff]
    %v632 = vld [vmem:[#allocation10 + $0x18] sm:$0xff]
    %v633 = vld [vmem:[#allocation10 + $0x20] sm:$0xff]
    %v634 = vld [vmem:[#allocation10 + $0x28] sm:$0xff]
    %v635 = vld [vmem:[#allocation10 + $0x30] sm:$0xff]
    %v636 = vld [vmem:[#allocation10 + $0x38] sm:$0xff]
    %v637 = vld [vmem:[#allocation10 + $0x40] sm:$0xff]
    %v638 = vld [vmem:[#allocation10 + $0x48] sm:$0xff]
    %v639 = vld [vmem:[#allocation10 + $0x50] sm:$0xff]
    %v640 = vld [vmem:[#allocation10 + $0x58] sm:$0xff]
    %v641 = vld [vmem:[#allocation10 + $0x60] sm:$0xff]
    %v642 = vld [vmem:[#allocation10 + $0x68] sm:$0xff]
    %v643 = vld [vmem:[#allocation10 + $0x70] sm:$0xff]
    %v644 = vld [vmem:[#allocation10 + $0x78] sm:$0xff]
    %645 = vmatprep.subr.mxu0 0.0
    %646 = vmatpush1.msra.mxu0 %v644
    %647 = vmatprep.subr.mxu0 0.0
    %648 = vmatpush1.msra.mxu0 %v643
    %649 = vmatprep.subr.mxu0 0.0
    %650 = vmatpush1.msra.mxu0 %v642
    %651 = vmatprep.subr.mxu0 0.0
    %652 = vmatpush1.msra.mxu0 %v641
    %653 = vmatprep.subr.mxu0 0.0
    %654 = vmatpush1.msra.mxu0 %v640
    %655 = vmatprep.subr.mxu0 0.0
    %656 = vmatpush1.msra.mxu0 %v639
    %657 = vmatprep.subr.mxu0 0.0
    %658 = vmatpush1.msra.mxu0 %v638
    %659 = vmatprep.subr.mxu0 0.0
    %660 = vmatpush1.msra.mxu0 %v637
    %661 = vmatprep.subr.mxu0 0.0
    %662 = vmatpush1.msra.mxu0 %v636
    %663 = vmatprep.subr.mxu0 0.0
    %664 = vmatpush1.msra.mxu0 %v635
    %665 = vmatprep.subr.mxu0 0.0
    %666 = vmatpush1.msra.mxu0 %v634
    %667 = vmatprep.subr.mxu0 0.0
    %668 = vmatpush1.msra.mxu0 %v633
    %669 = vmatprep.subr.mxu0 0.0
    %670 = vmatpush1.msra.mxu0 %v632
    %671 = vmatprep.subr.mxu0 0.0
    %672 = vmatpush1.msra.mxu0 %v631
    %673 = vmatprep.subr.mxu0 0.0
    %674 = vmatpush1.msra.mxu0 %v630
    %675 = vmatprep.subr.mxu0 0.0
    %676 = vmatpush1.msra.mxu0 %v629
    %677 = vmatprep.subr.mxu0 0.0
    %678 = vmatpush2.msra.mxu0 0.0
    %679 = vmatprep.subr.mxu0 0.0
    %680 = vmatpush2.msra.mxu0 0.0
    %681 = vmatprep.subr.mxu0 0.0
    %682 = vmatpush2.msra.mxu0 0.0
    %683 = vmatprep.subr.mxu0 0.0
    %684 = vmatpush2.msra.mxu0 0.0
    %685 = vmatprep.subr.mxu0 0.0
    %686 = vmatpush2.msra.mxu0 0.0
    %687 = vmatprep.subr.mxu0 0.0
    %688 = vmatpush2.msra.mxu0 0.0
    %689 = vmatprep.subr.mxu0 0.0
    %690 = vmatpush2.msra.mxu0 0.0
    %691 = vmatprep.subr.mxu0 0.0
    %692 = vmatpush2.msra.mxu0 0.0
    %693 = vmatprep.subr.mxu0 0.0
    %694 = vmatpush2.msra.mxu0 0.0
    %695 = vmatprep.subr.mxu0 0.0
    %696 = vmatpush2.msra.mxu0 0.0
    %697 = vmatprep.subr.mxu0 0.0
    %698 = vmatpush2.msra.mxu0 0.0
    %699 = vmatprep.subr.mxu0 0.0
    %700 = vmatpush2.msra.mxu0 0.0
    %701 = vmatprep.subr.mxu0 0.0
    %702 = vmatpush2.msra.mxu0 0.0
    %703 = vmatprep.subr.mxu0 0.0
    %704 = vmatpush2.msra.mxu0 0.0
    %705 = vmatprep.subr.mxu0 0.0
    %706 = vmatpush2.msra.mxu0 0.0
    %707 = vmatprep.subr.mxu0 0.0
    %708 = vmatpush2.msra.mxu0 0.0
    %709 = vmatprep.mubr.f32.mxu0 0.0
    %710 = vmatmul.mubr.f32.gmra.mxu0 %v408
    %v711 = vpop.f32.mrf.mxu0
    %v712 = vadd.f32 0.0, %v711
    %v713 = vpop.f32.mrf.mxu0
    %714 = vdwg.mxu0
    %v715 = vld [vmem:[%s15] sm:$0x1]
    %v717 = vlaneseq
    %v718 = vshrl.u32 %v717, 7
    %v719 = vsub.s32 0, %v718
    %v720 = vrot.slane %v715, %v719
    %v722 = vmul.f32 %v712, %v720
    %v723 = vld [vmem:[%s16] sm:$0x1]
    %v725 = vlaneseq
    %v726 = vshrl.u32 %v725, 7
    %v727 = vsub.s32 0, %v726
    %v728 = vrot.slane %v723, %v727
    %v730 = vadd.f32 %v722, %v728
    %v731 = vmax.f32 %v730, 0.0
    %v732 = vld [vmem:[#allocation11] sm:$0xff]
    %v733 = vld [vmem:[#allocation11 + $0x8] sm:$0xff]
    %v734 = vld [vmem:[#allocation11 + $0x10] sm:$0xff]
    %v735 = vld [vmem:[#allocation11 + $0x18] sm:$0xff]
    %v736 = vld [vmem:[#allocation11 + $0x20] sm:$0xff]
    %v737 = vld [vmem:[#allocation11 + $0x28] sm:$0xff]
    %v738 = vld [vmem:[#allocation11 + $0x30] sm:$0xff]
    %v739 = vld [vmem:[#allocation11 + $0x38] sm:$0xff]
    %v740 = vld [vmem:[#allocation11 + $0x40] sm:$0xff]
    %v741 = vld [vmem:[#allocation11 + $0x48] sm:$0xff]
    %v742 = vld [vmem:[#allocation11 + $0x50] sm:$0xff]
    %v743 = vld [vmem:[#allocation11 + $0x58] sm:$0xff]
    %v744 = vld [vmem:[#allocation11 + $0x60] sm:$0xff]
    %v745 = vld [vmem:[#allocation11 + $0x68] sm:$0xff]
    %v746 = vld [vmem:[#allocation11 + $0x70] sm:$0xff]
    %v747 = vld [vmem:[#allocation11 + $0x78] sm:$0xff]
    %748 = vmatprep.subr.mxu0 0.0
    %749 = vmatpush1.msra.mxu0 %v747
    %750 = vmatprep.subr.mxu0 0.0
    %751 = vmatpush1.msra.mxu0 %v746
    %752 = vmatprep.subr.mxu0 0.0
    %753 = vmatpush1.msra.mxu0 %v745
    %754 = vmatprep.subr.mxu0 0.0
    %755 = vmatpush1.msra.mxu0 %v744
    %756 = vmatprep.subr.mxu0 0.0
    %757 = vmatpush1.msra.mxu0 %v743
    %758 = vmatprep.subr.mxu0 0.0
    %759 = vmatpush1.msra.mxu0 %v742
    %760 = vmatprep.subr.mxu0 0.0
    %761 = vmatpush1.msra.mxu0 %v741
    %762 = vmatprep.subr.mxu0 0.0
    %763 = vmatpush1.msra.mxu0 %v740
    %764 = vmatprep.subr.mxu0 0.0
    %765 = vmatpush1.msra.mxu0 %v739
    %766 = vmatprep.subr.mxu0 0.0
    %767 = vmatpush1.msra.mxu0 %v738
    %768 = vmatprep.subr.mxu0 0.0
    %769 = vmatpush1.msra.mxu0 %v737
    %770 = vmatprep.subr.mxu0 0.0
    %771 = vmatpush1.msra.mxu0 %v736
    %772 = vmatprep.subr.mxu0 0.0
    %773 = vmatpush1.msra.mxu0 %v735
    %774 = vmatprep.subr.mxu0 0.0
    %775 = vmatpush1.msra.mxu0 %v734
    %776 = vmatprep.subr.mxu0 0.0
    %777 = vmatpush1.msra.mxu0 %v733
    %778 = vmatprep.subr.mxu0 0.0
    %779 = vmatpush1.msra.mxu0 %v732
    %780 = vmatprep.subr.mxu0 0.0
    %781 = vmatpush2.msra.mxu0 0.0
    %782 = vmatprep.subr.mxu0 0.0
    %783 = vmatpush2.msra.mxu0 0.0
    %784 = vmatprep.subr.mxu0 0.0
    %785 = vmatpush2.msra.mxu0 0.0
    %786 = vmatprep.subr.mxu0 0.0
    %787 = vmatpush2.msra.mxu0 0.0
    %788 = vmatprep.subr.mxu0 0.0
    %789 = vmatpush2.msra.mxu0 0.0
    %790 = vmatprep.subr.mxu0 0.0
    %791 = vmatpush2.msra.mxu0 0.0
    %792 = vmatprep.subr.mxu0 0.0
    %793 = vmatpush2.msra.mxu0 0.0
    %794 = vmatprep.subr.mxu0 0.0
    %795 = vmatpush2.msra.mxu0 0.0
    %796 = vmatprep.subr.mxu0 0.0
    %797 = vmatpush2.msra.mxu0 0.0
    %798 = vmatprep.subr.mxu0 0.0
    %799 = vmatpush2.msra.mxu0 0.0
    %800 = vmatprep.subr.mxu0 0.0
    %801 = vmatpush2.msra.mxu0 0.0
    %802 = vmatprep.subr.mxu0 0.0
    %803 = vmatpush2.msra.mxu0 0.0
    %804 = vmatprep.subr.mxu0 0.0
    %805 = vmatpush2.msra.mxu0 0.0
    %806 = vmatprep.subr.mxu0 0.0
    %807 = vmatpush2.msra.mxu0 0.0
    %808 = vmatprep.subr.mxu0 0.0
    %809 = vmatpush2.msra.mxu0 0.0
    %810 = vmatprep.subr.mxu0 0.0
    %811 = vmatpush2.msra.mxu0 0.0
    %812 = vmatprep.mubr.f32.mxu0 0.0
    %813 = vmatmul.mubr.f32.gmra.mxu0 %v731
    %v814 = vpop.f32.mrf.mxu0
    %v815 = vadd.f32 0.0, %v814
    %v816 = vpop.f32.mrf.mxu0
    %817 = vdwg.mxu0
    %v818 = vld [vmem:[%s18] sm:$0x1]
    %v820 = vlaneseq
    %v821 = vshrl.u32 %v820, 7
    %v822 = vsub.s32 0, %v821
    %v823 = vrot.slane %v818, %v822
    %v825 = vmul.f32 %v815, %v823
    %v826 = vld [vmem:[%s19] sm:$0x1]
    %v828 = vlaneseq
    %v829 = vshrl.u32 %v828, 7
    %v830 = vsub.s32 0, %v829
    %v831 = vrot.slane %v826, %v830
    %v833 = vadd.f32 %v825, %v831
    %v834 = vmax.f32 %v833, 0.0
    %v835 = vld [vmem:[#allocation13] sm:$0xff]
    %v836 = vld [vmem:[#allocation13 + $0x8] sm:$0xff]
    %v837 = vld [vmem:[#allocation13 + $0x10] sm:$0xff]
    %v838 = vld [vmem:[#allocation13 + $0x18] sm:$0xff]
    %v839 = vld [vmem:[#allocation13 + $0x20] sm:$0xff]
    %v840 = vld [vmem:[#allocation13 + $0x28] sm:$0xff]
    %v841 = vld [vmem:[#allocation13 + $0x30] sm:$0xff]
    %v842 = vld [vmem:[#allocation13 + $0x38] sm:$0xff]
    %v843 = vld [vmem:[#allocation13 + $0x40] sm:$0xff]
    %v844 = vld [vmem:[#allocation13 + $0x48] sm:$0xff]
    %v845 = vld [vmem:[#allocation13 + $0x50] sm:$0xff]
    %v846 = vld [vmem:[#allocation13 + $0x58] sm:$0xff]
    %v847 = vld [vmem:[#allocation13 + $0x60] sm:$0xff]
    %v848 = vld [vmem:[#allocation13 + $0x68] sm:$0xff]
    %v849 = vld [vmem:[#allocation13 + $0x70] sm:$0xff]
    %v850 = vld [vmem:[#allocation13 + $0x78] sm:$0xff]
    %851 = vmatprep.subr.mxu0 0.0
    %852 = vmatpush1.msra.mxu0 %v850
    %853 = vmatprep.subr.mxu0 0.0
    %854 = vmatpush1.msra.mxu0 %v849
    %855 = vmatprep.subr.mxu0 0.0
    %856 = vmatpush1.msra.mxu0 %v848
    %857 = vmatprep.subr.mxu0 0.0
    %858 = vmatpush1.msra.mxu0 %v847
    %859 = vmatprep.subr.mxu0 0.0
    %860 = vmatpush1.msra.mxu0 %v846
    %861 = vmatprep.subr.mxu0 0.0
    %862 = vmatpush1.msra.mxu0 %v845
    %863 = vmatprep.subr.mxu0 0.0
    %864 = vmatpush1.msra.mxu0 %v844
    %865 = vmatprep.subr.mxu0 0.0
    %866 = vmatpush1.msra.mxu0 %v843
    %867 = vmatprep.subr.mxu0 0.0
    %868 = vmatpush1.msra.mxu0 %v842
    %869 = vmatprep.subr.mxu0 0.0
    %870 = vmatpush1.msra.mxu0 %v841
    %871 = vmatprep.subr.mxu0 0.0
    %872 = vmatpush1.msra.mxu0 %v840
    %873 = vmatprep.subr.mxu0 0.0
    %874 = vmatpush1.msra.mxu0 %v839
    %875 = vmatprep.subr.mxu0 0.0
    %876 = vmatpush1.msra.mxu0 %v838
    %877 = vmatprep.subr.mxu0 0.0
    %878 = vmatpush1.msra.mxu0 %v837
    %879 = vmatprep.subr.mxu0 0.0
    %880 = vmatpush1.msra.mxu0 %v836
    %881 = vmatprep.subr.mxu0 0.0
    %882 = vmatpush1.msra.mxu0 %v835
    %883 = vmatprep.subr.mxu0 0.0
    %884 = vmatpush2.msra.mxu0 0.0
    %885 = vmatprep.subr.mxu0 0.0
    %886 = vmatpush2.msra.mxu0 0.0
    %887 = vmatprep.subr.mxu0 0.0
    %888 = vmatpush2.msra.mxu0 0.0
    %889 = vmatprep.subr.mxu0 0.0
    %890 = vmatpush2.msra.mxu0 0.0
    %891 = vmatprep.subr.mxu0 0.0
    %892 = vmatpush2.msra.mxu0 0.0
    %893 = vmatprep.subr.mxu0 0.0
    %894 = vmatpush2.msra.mxu0 0.0
    %895 = vmatprep.subr.mxu0 0.0
    %896 = vmatpush2.msra.mxu0 0.0
    %897 = vmatprep.subr.mxu0 0.0
    %898 = vmatpush2.msra.mxu0 0.0
    %899 = vmatprep.subr.mxu0 0.0
    %900 = vmatpush2.msra.mxu0 0.0
    %901 = vmatprep.subr.mxu0 0.0
    %902 = vmatpush2.msra.mxu0 0.0
    %903 = vmatprep.subr.mxu0 0.0
    %904 = vmatpush2.msra.mxu0 0.0
    %905 = vmatprep.subr.mxu0 0.0
    %906 = vmatpush2.msra.mxu0 0.0
    %907 = vmatprep.subr.mxu0 0.0
    %908 = vmatpush2.msra.mxu0 0.0
    %909 = vmatprep.subr.mxu0 0.0
    %910 = vmatpush2.msra.mxu0 0.0
    %911 = vmatprep.subr.mxu0 0.0
    %912 = vmatpush2.msra.mxu0 0.0
    %913 = vmatprep.subr.mxu0 0.0
    %914 = vmatpush2.msra.mxu0 0.0
    %915 = vmatprep.mubr.f32.mxu0 0.0
    %916 = vmatmul.mubr.f32.gmra.mxu0 %v834
    %v917 = vpop.f32.mrf.mxu0
    %v918 = vadd.f32 0.0, %v917
    %v919 = vpop.f32.mrf.mxu0
    %920 = vdwg.mxu0
    %v921 = vld [vmem:[%s21] sm:$0x1]
    %v923 = vlaneseq
    %v924 = vshrl.u32 %v923, 7
    %v925 = vsub.s32 0, %v924
    %v926 = vrot.slane %v921, %v925
    %v928 = vmul.f32 %v918, %v926
    %v929 = vld [vmem:[%s22] sm:$0x1]
    %v931 = vlaneseq
    %v932 = vshrl.u32 %v931, 7
    %v933 = vsub.s32 0, %v932
    %v934 = vrot.slane %v929, %v933
    %v936 = vadd.f32 %v928, %v934
    %937 = vmax.xlane.f32.xlu0 %v936
    %v938 = vpop.xlane.xlu0 %937
    %v939 = vsub.f32 %v936, %v938
    %v940 = vmul.f32 %v939, 1.442695
    %v941 = vpow.pop %v940
    %942 = vadd.xlane.f32.xlu0 %v941
    %v943 = vpop.xlane.xlu0 %942
    %v944 = vrcp.pop %v943
    %v945 = vmul.f32 %v941, %v944
    %946 = vst [vmem:[%s26] sm:$0xff] %v945
    // Predicated region
    $region122: #{single_sparse_infer.1} parent=1 // pred_check
      _
    $region123: #{single_sparse_infer.1} parent=1 // pred_check_branch
      %948 = sbr.rel (0) target = $region125
    $region124: #{single_sparse_infer.1} parent=1 // pred_region
      %s950 = ssub.s32 128, 128
      %951 = vsyncadd [#allocation4], %s950
      %s953 = sshll.u32 [#allocation14], 4
      %s954 = int_to_ptr.vmem [resolvable:$true] %s953
      %956 = dma.vmem_to_hbm [thread:$0]  %s954, 128, %s23, [#allocation4]
    $region125: #{single_sparse_infer.1} parent=1 // pred_fallthru
      _
    // Predicated region
    $region126: #{single_sparse_infer.1} parent=1 // pred_check
      _
    $region127: #{single_sparse_infer.1} parent=1 // pred_check_branch
      %958 = sbr.rel (0) target = $region129
    $region128: #{single_sparse_infer.1} parent=1 // pred_region
      %s960 = ssub.s32 128, 128
      %961 = vsyncadd [#allocation16], %s960
      %s963 = sshll.u32 [#allocation15], 4
      %s964 = int_to_ptr.vmem [resolvable:$true] %s963
      %966 = dma.vmem_to_hbm [thread:$0]  %s964, 128, %s24, [#allocation16]
    $region129: #{single_sparse_infer.1} parent=1 // pred_fallthru
      _
    // Predicated region
    $region130: #{single_sparse_infer.1} parent=1 // pred_check
      _
    $region131: #{single_sparse_infer.1} parent=1 // pred_check_branch
      %968 = sbr.rel (0) target = $region133
    $region132: #{single_sparse_infer.1} parent=1 // pred_region
      %s970 = ssub.s32 128, 128
      %971 = vsyncadd [#allocation16], %s970
      %s973 = sshll.u32 [#allocation17], 4
      %s974 = int_to_ptr.vmem [resolvable:$true] %s973
      %976 = dma.vmem_to_hbm [thread:$0]  %s974, 128, %s25, [#allocation16]
    $region133: #{single_sparse_infer.1} parent=1 // pred_fallthru
      _
    // Predicated region
    $region134: #{single_sparse_infer.1} parent=1 // pred_check
      _
    $region135: #{single_sparse_infer.1} parent=1 // pred_check_branch
      %978 = sbr.rel (0) target = $region137
    $region136: #{single_sparse_infer.1} parent=1 // pred_region
      _
    $region137: #{single_sparse_infer.1} parent=1 // pred_fallthru
      _
    // Predicated region
    $region138: #{single_sparse_infer.1} parent=1 // pred_check
      _
    $region139: #{single_sparse_infer.1} parent=1 // pred_check_branch
      %980 = sbr.rel (0) target = $region141
    $region140: #{single_sparse_infer.1} parent=1 // pred_region
      %981 = dma.done [#allocation4], 128
    $region141: #{single_sparse_infer.1} parent=1 // pred_fallthru
      _
    // Predicated region
    $region142: #{single_sparse_infer.1} parent=1 // pred_check
      _
    $region143: #{single_sparse_infer.1} parent=1 // pred_check_branch
      %983 = sbr.rel (0) target = $region145
    $region144: #{single_sparse_infer.1} parent=1 // pred_region
      %984 = dma.done [#allocation16], 128
    $region145: #{single_sparse_infer.1} parent=1 // pred_fallthru
      _
    // Predicated region
    $region146: #{single_sparse_infer.1} parent=1 // pred_check
      _
    $region147: #{single_sparse_infer.1} parent=1 // pred_check_branch
      %986 = sbr.rel (0) target = $region149
    $region148: #{single_sparse_infer.1} parent=1 // pred_region
      %987 = dma.done [#allocation16], 128
    $region149: #{single_sparse_infer.1} parent=1 // pred_fallthru
      _
    // Predicated region
    $region150: #{single_sparse_infer.1} parent=1 // pred_check
      _
    $region151: #{single_sparse_infer.1} parent=1 // pred_check_branch
      %989 = sbr.rel (0) target = $region153
    $region152: #{single_sparse_infer.1} parent=1 // pred_region
      _
    $region153: #{single_sparse_infer.1} parent=1 // pred_fallthru
      _
    %990 = vsyncpa [#allocation3], 1
    %991 = vsyncpa [#allocation6], 1
    %992 = vsyncpa [#allocation9], 1
    %993 = vsyncpa [#allocation12], 1
    %994 = vsyncpa [#allocation4], 1
    %995 = vsyncpa [#allocation16], 1

</llo_original>
